<compile_context>
chip_gen: v7x
topology: tpu7x:2x2x1
jax: 0.10.0
libtpu: 0.0.40
codegen_flags: <defaults>
</compile_context>

<pallas_src>
import functools

import jax
import jax.numpy as jnp
from jax import lax
from jax.experimental import pallas as pl
from jax.experimental.pallas import tpu as pltpu


def _round_up(x, m):
    return ((x + m - 1) // m) * m


def _pick_tile(n, target):
    """Largest power-of-two multiple of 128 <= target that divides n (n is a multiple of 128)."""
    t = 128
    while t * 2 <= target and n % (t * 2) == 0:
        t *= 2
    return min(t, n)


def _vmem_capacity_bytes(default=64 * 1024 * 1024):
    """Physical VMEM per TensorCore; conservative 64 MiB (v7x) fallback."""
    try:
        info = pltpu.get_tpu_info()
    except Exception:
        return default
    for attr in ("vmem_capacity_bytes", "vmem_bytes", "vmem_size_bytes"):
        v = getattr(info, attr, None)
        if v is None:
            continue
        try:
            v = int(v)
        except Exception:
            continue
        if v > 0:
            return v
    return default


# ----------------------------------------------------------------------------
# Stage 1: one full LightGCN propagation layer, tiled (rows x K), fused running
# layer-sum:  e_out = G @ e_in ;  acc_out = acc_in + e_out
# ----------------------------------------------------------------------------
def _propagate_kernel(g_ref, e_ref, acc_ref, e_out_ref, acc_out_ref, scratch_ref):
    kk = pl.program_id(1)

    @pl.when(kk == 0)
    def _():
        scratch_ref[...] = jnp.zeros_like(scratch_ref)

    scratch_ref[...] += jnp.dot(
        g_ref[...], e_ref[...].astype(g_ref.dtype),
        preferred_element_type=jnp.float32,
    )

    @pl.when(kk == pl.num_programs(1) - 1)
    def _():
        e_new = scratch_ref[...]
        e_out_ref[...] = e_new
        acc_out_ref[...] = acc_ref[...] + e_new


def _propagate(g, e, acc, *, t, vmem_limit):
    n_pad, d_pad = e.shape
    grid = (n_pad // t, n_pad // t)
    return pl.pallas_call(
        _propagate_kernel,
        out_shape=(
            jax.ShapeDtypeStruct((n_pad, d_pad), jnp.float32),
            jax.ShapeDtypeStruct((n_pad, d_pad), jnp.float32),
        ),
        grid=grid,
        in_specs=[
            pl.BlockSpec((t, t), lambda i, kk: (i, kk)),
            pl.BlockSpec((t, d_pad), lambda i, kk: (kk, 0)),
            pl.BlockSpec((t, d_pad), lambda i, kk: (i, 0)),
        ],
        out_specs=[
            pl.BlockSpec((t, d_pad), lambda i, kk: (i, 0)),
            pl.BlockSpec((t, d_pad), lambda i, kk: (i, 0)),
        ],
        scratch_shapes=[pltpu.VMEM((t, d_pad), jnp.float32)],
        compiler_params=pltpu.CompilerParams(
            dimension_semantics=("parallel", "arbitrary"),
            vmem_limit_bytes=vmem_limit,
        ),
    )(g, e, acc)


# ----------------------------------------------------------------------------
# Stage 1 (last layer): item rows only.  items_sum = acc[items] + G[items, :] @ e
# The user/item boundary (u_pad) is tile-aligned, so the item rows of G / acc are
# selected purely through the index_map — no wrapper-side slice copy of G.
# ----------------------------------------------------------------------------
def _propagate_items_kernel(g_ref, e_ref, acc_ref, out_ref, scratch_ref):
    kk = pl.program_id(1)

    @pl.when(kk == 0)
    def _():
        scratch_ref[...] = jnp.zeros_like(scratch_ref)

    scratch_ref[...] += jnp.dot(
        g_ref[...], e_ref[...].astype(g_ref.dtype),
        preferred_element_type=jnp.float32,
    )

    @pl.when(kk == pl.num_programs(1) - 1)
    def _():
        out_ref[...] = acc_ref[...] + scratch_ref[...]


def _propagate_items(g, e, acc, *, m_pad, u_blocks, t, vmem_limit):
    n_pad, d_pad = e.shape
    grid = (m_pad // t, n_pad // t)
    return pl.pallas_call(
        _propagate_items_kernel,
        out_shape=jax.ShapeDtypeStruct((m_pad, d_pad), jnp.float32),
        grid=grid,
        in_specs=[
            pl.BlockSpec((t, t), lambda i, kk: (i + u_blocks, kk)),      # item rows of G
            pl.BlockSpec((t, d_pad), lambda i, kk: (kk, 0)),
            pl.BlockSpec((t, d_pad), lambda i, kk: (i + u_blocks, 0)),   # item rows of acc
        ],
        out_specs=pl.BlockSpec((t, d_pad), lambda i, kk: (i, 0)),
        scratch_shapes=[pltpu.VMEM((t, d_pad), jnp.float32)],
        compiler_params=pltpu.CompilerParams(
            dimension_semantics=("parallel", "arbitrary"),
            vmem_limit_bytes=vmem_limit,
        ),
    )(g, e, acc)


# ----------------------------------------------------------------------------
# Stage 1b: L2 row-normalize (F.normalize, p=2, eps=1e-12) of the layer-SUM
# (dividing by n_layers+1 first is a no-op under row normalization), with a
# fused transposed output (D, M_pad) so Stage 2's RHS is already MXU-natural.
# Zero-padded rows normalize to zero (0 / 1e-12 = 0).
# ----------------------------------------------------------------------------
def _normalize_kernel(x_ref, out_ref, outt_ref):
    x = x_ref[...]
    norm = jnp.sqrt(jnp.sum(x * x, axis=1, keepdims=True))
    xn = x / jnp.maximum(norm, 1e-12)
    out_ref[...] = xn
    outt_ref[...] = xn.T


def _normalize(items_sum, *, vmem_limit):
    m_pad, d_pad = items_sum.shape
    tm = _pick_tile(m_pad, 512)
    return pl.pallas_call(
        _normalize_kernel,
        out_shape=(
            jax.ShapeDtypeStruct((m_pad, d_pad), jnp.float32),
            jax.ShapeDtypeStruct((d_pad, m_pad), jnp.float32),
        ),
        grid=(m_pad // tm,),
        in_specs=[pl.BlockSpec((tm, d_pad), lambda i: (i, 0))],
        out_specs=[
            pl.BlockSpec((tm, d_pad), lambda i: (i, 0)),
            pl.BlockSpec((d_pad, tm), lambda i: (0, i)),
        ],
        compiler_params=pltpu.CompilerParams(
            dimension_semantics=("parallel",),
            vmem_limit_bytes=vmem_limit,
        ),
    )(items_sum)


# ----------------------------------------------------------------------------
# Stage 2: row-tiled cosine similarity + exact per-row top-(k+1) threshold + relu.
#   rows_ref  : (tm, d_pad)     this tile's normalized item rows (LHS)
#   itemst_ref: (d_pad, m_pad)  all normalized items, pre-transposed (RHS, resident)
#   out_ref   : (tm, m_pad)     lane-dense output tile
# ----------------------------------------------------------------------------
def _sim_topk_kernel(rows_ref, itemst_ref, out_ref, *, k_keep, num_items):
    rows = rows_ref[...]
    itemst = itemst_ref[...]

    # Natural MXU layout (M,K)@(K,N) — no per-grid-step relayout of the resident RHS.
    sim = jnp.dot(rows, itemst, preferred_element_type=jnp.float32)   # (tm, m_pad)

    neg_inf = jnp.float32(-jnp.inf)
    col = lax.broadcasted_iota(jnp.int32, sim.shape, 1)
    sim = jnp.where(col < num_items, sim, neg_inf)   # padded columns never enter the top-k

    # Exact (k+1)-th order statistic per row (matches torch.topk / lax.top_k threshold,
    # including ties): iterate over distinct maxima, tracking how many entries were consumed.
    kfl = jnp.float32(k_keep)
    work = sim
    kth = jnp.full((sim.shape[0], 1), neg_inf, jnp.float32)
    consumed = jnp.zeros((sim.shape[0], 1), jnp.float32)
    for _ in range(k_keep):
        v = jnp.max(work, axis=1, keepdims=True)                 # XLU row-max (own slot)
        kth = jnp.where(consumed < kfl, v, kth)
        geq = work >= v
        consumed = consumed + jnp.sum(geq.astype(jnp.float32), axis=1, keepdims=True)
        work = jnp.where(geq, neg_inf, work)
    # TODO(synk): for large k (k+1 >~ 16) replace this O(k) full-width loop with a
    # bit-pattern binary search for the threshold (cost independent of k).

    # Fused top-k mask + relu (single full-width pass). Equivalent to
    # relu(where(sim >= kth, sim, 0)) and guarantees no -inf ever leaks out.
    out_ref[...] = jnp.where((sim >= kth) & (sim > 0.0), sim, 0.0)


def _sim_topk(items_n, items_nt, *, num_items, k_keep, vmem_limit):
    m_pad, d_pad = items_n.shape
    budget = vmem_limit - (4 << 20)   # headroom for compiler scratch

    def need(tm):
        return (2 * tm * d_pad        # rows, double-buffered
                + 1 * d_pad * m_pad   # resident items^T, single-buffered
                + 2 * tm * m_pad      # output tile, double-buffered
                + 4 * tm * m_pad      # sim/work/mask temporaries headroom
                ) * 4

    # Prefer tm=256 (MXU M-width on v6e/v7x) when the generation-aware budget allows.
    tm = 256
    while tm > 128 and (m_pad % tm != 0 or need(tm) > budget):
        tm //= 2
    tm = min(tm, m_pad)
    # TODO(synk): for very large num_items add a column-tile grid axis (two-pass
    # threshold) instead of relying on a single (tm, m_pad) output tile.

    kernel = functools.partial(_sim_topk_kernel, k_keep=k_keep, num_items=num_items)

    def run(resident_buffer_count):
        itemst_kwargs = {}
        if resident_buffer_count is not None:
            itemst_kwargs["pipeline_mode"] = pl.Buffered(resident_buffer_count)
        return pl.pallas_call(
            kernel,
            out_shape=jax.ShapeDtypeStruct((m_pad, m_pad), jnp.float32),
            grid=(m_pad // tm,),
            in_specs=[
                pl.BlockSpec((tm, d_pad), lambda i: (i, 0)),
                pl.BlockSpec((d_pad, m_pad), lambda i: (0, 0), **itemst_kwargs),
            ],
            out_specs=pl.BlockSpec((tm, m_pad), lambda i: (i, 0)),
            compiler_params=pltpu.CompilerParams(
                dimension_semantics=("parallel",),
                vmem_limit_bytes=vmem_limit,
            ),
        )(items_n, items_nt)

    try:
        # The resident items^T never changes across the grid: single-buffer it.
        return run(1)
    except Exception:
        return run(None)


# ----------------------------------------------------------------------------
# Wrapper: build aligned-padded layout, run the three stages, un-pad.
# ----------------------------------------------------------------------------
def lightgcn_learner_forward(graph, user_emb, item_emb, *, n_layers, k,
                             graph_dtype=jnp.float32):
    num_users, isize = user_emb.shape
    num_items = item_emb.shape[0]
    f32 = jnp.float32

    # --- generation-aware VMEM limits / tiling ---
    vmem_cap = _vmem_capacity_bytes()
    vmem_limit = int(vmem_cap * 3 // 4)

    d_pad = _round_up(isize, 128)   # lane-dense feature dim (no masked partial stores)

    def _align_for(n):
        # 512-row tiles hit ~85% of HBM roofline vs ~29% at 128; only pay the padding
        # when the dimension is big enough that the waste is negligible.
        return 512 if n >= 4096 else 128

    u_pad = _round_up(num_users, _align_for(num_users))
    m_pad = _round_up(num_items, _align_for(num_items))
    n_pad = u_pad + m_pad

    # Stage-1 tile (rows and K): largest power-of-two <= 512 dividing both u_pad and m_pad,
    # so the item block starts on a tile boundary (item-rows-only last layer).
    t1 = 128
    while t1 * 2 <= 512 and u_pad % (t1 * 2) == 0 and m_pad % (t1 * 2) == 0:
        t1 *= 2

    graph = graph.astype(f32)
    user_emb = user_emb.astype(f32)
    item_emb = item_emb.astype(f32)

    # --- aligned-padded graph & embeddings: layout [users (u_pad) | items (m_pad)] ---
    # Padding rows/cols are zero, so propagation / normalize / similarity are unchanged.
    g_p = jnp.zeros((n_pad, n_pad), f32)
    g_p = g_p.at[:num_users, :num_users].set(graph[:num_users, :num_users])
    g_p = g_p.at[:num_users, u_pad:u_pad + num_items].set(graph[:num_users, num_users:])
    g_p = g_p.at[u_pad:u_pad + num_items, :num_users].set(graph[num_users:, :num_users])
    g_p = g_p.at[u_pad:u_pad + num_items, u_pad:u_pad + num_items].set(graph[num_users:, num_users:])
    # Optional bf16 graph halves Stage-1 HBM traffic; default f32 to keep top-k selection
    # bit-consistent with the reference (near-tie similarities could otherwise flip).
    g_p = g_p.astype(graph_dtype)

    e_p = jnp.zeros((n_pad, d_pad), f32)
    e_p = e_p.at[:num_users, :isize].set(user_emb)
    e_p = e_p.at[u_pad:u_pad + num_items, :isize].set(item_emb)

    # --- Stage 1: propagation with fused running layer-sum; last layer item rows only ---
    e_cur, acc = e_p, e_p
    if n_layers >= 1:
        for _ in range(n_layers - 1):
            e_cur, acc = _propagate(g_p, e_cur, acc, t=t1, vmem_limit=vmem_limit)
        items_sum = _propagate_items(
            g_p, e_cur, acc, m_pad=m_pad, u_blocks=u_pad // t1, t=t1,
            vmem_limit=vmem_limit)
    else:
        items_sum = lax.slice(e_p, (u_pad, 0), (u_pad + m_pad, d_pad))

    # --- Stage 1b: L2 normalize (+ fused transpose for Stage-2 RHS) ---
    items_n, items_nt = _normalize(items_sum, vmem_limit=vmem_limit)

    # --- Stage 2: similarity + top-(k+1) + relu ---
    sim = _sim_topk(items_n, items_nt, num_items=num_items, k_keep=k + 1,
                    vmem_limit=vmem_limit)

    return sim[:num_items, :num_items]


# ----------------------------------------------------------------------------
# Pure-JAX reference (correctness check).
# ----------------------------------------------------------------------------
def _reference(graph, user_emb, item_emb, n_layers, k):
    num_users = user_emb.shape[0]
    e = jnp.concatenate([user_emb, item_emb], axis=0)
    embs = [e]
    for _ in range(n_layers):
        e = graph @ e
        embs.append(e)
    light_out = jnp.mean(jnp.stack(embs, axis=1), axis=1)
    items = light_out[num_users:]
    items_n = items / jnp.maximum(
        jnp.linalg.norm(items, axis=1, keepdims=True), 1e-12)
    sim = items_n @ items_n.T
    kth = jax.lax.top_k(sim, k + 1)[0][:, -1:]
    masked = jnp.where(sim >= kth, sim, 0.0)
    return jnp.maximum(masked, 0.0)


def _make_normalized_graph(key, num_users, num_items):
    """Synthetic D^{-1/2} A D^{-1/2} bipartite graph (dense), as in getSparseGraph()."""
    r = (jax.random.uniform(key, (num_users, num_items)) < 0.3).astype(jnp.float32)
    n = num_users + num_items
    adj = jnp.zeros((n, n), jnp.float32)
    adj = adj.at[:num_users, num_users:].set(r)
    adj = adj.at[num_users:, :num_users].set(r.T)
    deg = jnp.sum(adj, axis=1)
    d_inv_sqrt = jnp.where(deg > 0, deg ** -0.5, 0.0)
    return adj * d_inv_sqrt[:, None] * d_inv_sqrt[None, :]
    # TODO(synk): original uses torch.sparse.mm on a sparse COO graph; realised densely here.


if __name__ == "__main__":
    # Small, deterministic synthetic setup consistent with the module's __init__.
    num_users, num_items = 16, 32
    isize = 32          # embedding dim
    n_layers = 2
    k = 4               # top-(k+1) kept per row

    key = jax.random.PRNGKey(0)
    k_graph, k_user, k_item = jax.random.split(key, 3)

    graph = _make_normalized_graph(k_graph, num_users, num_items)
    # nn.init.normal_(std=0.1)
    user_emb = 0.1 * jax.random.normal(k_user, (num_users, isize), jnp.float32)
    item_emb = 0.1 * jax.random.normal(k_item, (num_items, isize), jnp.float32)

    out = lightgcn_learner_forward(graph, user_emb, item_emb, n_layers=n_layers, k=k)
    out = jax.block_until_ready(out)

    ref = _reference(graph, user_emb, item_emb, n_layers, k)
    assert out.shape == (num_items, num_items)
    assert jnp.allclose(out, ref, atol=1e-5, rtol=1e-5), "kernel mismatch vs reference"

    print("KERNEL_OK")
</pallas_src>

<mosaic_0001>
module attributes {stable_mosaic.version = 11 : i64} {
  func.func @_propagate_kernel(%arg0: i32, %arg1: i32, %arg2: memref<128x128xf32, #tpu.memory_space<vmem>>, %arg3: memref<128x128xf32, #tpu.memory_space<vmem>>, %arg4: memref<128x128xf32, #tpu.memory_space<vmem>>, %arg5: memref<128x128xf32, #tpu.memory_space<vmem>>, %arg6: memref<128x128xf32, #tpu.memory_space<vmem>>, %arg7: memref<128x128xf32, #tpu.memory_space<vmem>>) attributes {dimension_semantics = [#tpu.dimension_semantics<parallel>, #tpu.dimension_semantics<arbitrary>], iteration_bounds = array<i64: 2, 2>, scalar_prefetch = 0 : i64, scratch_operands = 1 : i64, tpu.core_type = #tpu.core_type<tc>, window_params = [{transform_indices = @transform_0, window_bounds = array<i64: 128, 128>}, {transform_indices = @transform_1, window_bounds = array<i64: 128, 128>}, {transform_indices = @transform_2, window_bounds = array<i64: 128, 128>}, {transform_indices = @transform_3, window_bounds = array<i64: 128, 128>}, {transform_indices = @transform_4, window_bounds = array<i64: 128, 128>}]} {
    %c0_i32 = arith.constant 0 : i32
    %0 = arith.cmpi eq, %arg1, %c0_i32 : i32
    %1 = arith.extui %0 : i1 to i32
    %c0_i32_0 = arith.constant 0 : i32
    %2 = arith.cmpi ne, %1, %c0_i32_0 : i32
    scf.if %2 {
      %cst_9 = arith.constant 0.000000e+00 : f32
      %12 = vector.broadcast %cst_9 : f32 to vector<128x128xf32>
      %c0_10 = arith.constant 0 : index
      %c0_11 = arith.constant 0 : index
      %13 = vector.load %arg7[%c0_10, %c0_11] : memref<128x128xf32, #tpu.memory_space<vmem>>, vector<128x128xf32>
      tpu.vector_store %arg7[%c0_10, %c0_11], %12 {strides = array<i32>} : memref<128x128xf32, #tpu.memory_space<vmem>>, vector<128x128xf32>,
    } else {
    }
    %c0 = arith.constant 0 : index
    %c0_1 = arith.constant 0 : index
    %3 = vector.load %arg7[%c0, %c0_1] : memref<128x128xf32, #tpu.memory_space<vmem>>, vector<128x128xf32>
    %c0_2 = arith.constant 0 : index
    %c0_3 = arith.constant 0 : index
    %4 = vector.load %arg2[%c0_2, %c0_3] : memref<128x128xf32, #tpu.memory_space<vmem>>, vector<128x128xf32>
    %c0_4 = arith.constant 0 : index
    %c0_5 = arith.constant 0 : index
    %5 = vector.load %arg3[%c0_4, %c0_5] : memref<128x128xf32, #tpu.memory_space<vmem>>, vector<128x128xf32>
    %cst = arith.constant dense<0.000000e+00> : vector<128x128xf32>
    %6 = tpu.matmul %4, %5, %cst {dimension_numbers = #tpu.dot_dimension_numbers<[1], [0], [0], [1], [0, 0, 1, 1], [], []>} : vector<128x128xf32>, vector<128x128xf32>, vector<128x128xf32> -> vector<128x128xf32>
    %7 = arith.addf %3, %6 : vector<128x128xf32>
    %c0_6 = arith.constant 0 : index
    %c0_7 = arith.constant 0 : index
    %8 = vector.load %arg7[%c0_6, %c0_7] : memref<128x128xf32, #tpu.memory_space<vmem>>, vector<128x128xf32>
    tpu.vector_store %arg7[%c0_6, %c0_7], %7 {strides = array<i32>} : memref<128x128xf32, #tpu.memory_space<vmem>>, vector<128x128xf32>,
    %c1_i32 = arith.constant 1 : i32
    %9 = arith.cmpi eq, %arg1, %c1_i32 : i32
    %10 = arith.extui %9 : i1 to i32
    %c0_i32_8 = arith.constant 0 : i32
    %11 = arith.cmpi ne, %10, %c0_i32_8 : i32
    scf.if %11 {
      %c0_9 = arith.constant 0 : index
      %c0_10 = arith.constant 0 : index
      %12 = vector.load %arg7[%c0_9, %c0_10] : memref<128x128xf32, #tpu.memory_space<vmem>>, vector<128x128xf32>
      %c0_11 = arith.constant 0 : index
      %c0_12 = arith.constant 0 : index
      %13 = vector.load %arg5[%c0_11, %c0_12] : memref<128x128xf32, #tpu.memory_space<vmem>>, vector<128x128xf32>
      tpu.vector_store %arg5[%c0_11, %c0_12], %12 {strides = array<i32>} : memref<128x128xf32, #tpu.memory_space<vmem>>, vector<128x128xf32>,
      %c0_13 = arith.constant 0 : index
      %c0_14 = arith.constant 0 : index
      %14 = vector.load %arg4[%c0_13, %c0_14] : memref<128x128xf32, #tpu.memory_space<vmem>>, vector<128x128xf32>
      %15 = arith.addf %14, %12 : vector<128x128xf32>
      %c0_15 = arith.constant 0 : index
      %c0_16 = arith.constant 0 : index
      %16 = vector.load %arg6[%c0_15, %c0_16] : memref<128x128xf32, #tpu.memory_space<vmem>>, vector<128x128xf32>
      tpu.vector_store %arg6[%c0_15, %c0_16], %15 {strides = array<i32>} : memref<128x128xf32, #tpu.memory_space<vmem>>, vector<128x128xf32>,
    } else {
    }
    return
  }
  func.func @transform_0(%arg0: i32, %arg1: i32) -> (i32, i32) {
    %c0_i32 = arith.constant 0 : i32
    return %arg0, %arg1 : i32, i32
  }
  func.func @transform_1(%arg0: i32, %arg1: i32) -> (i32, i32) {
    %c0_i32 = arith.constant 0 : i32
    %c0_i32_0 = arith.constant 0 : i32
    return %arg1, %c0_i32 : i32, i32
  }
  func.func @transform_2(%arg0: i32, %arg1: i32) -> (i32, i32) {
    %c0_i32 = arith.constant 0 : i32
    %c0_i32_0 = arith.constant 0 : i32
    return %arg0, %c0_i32 : i32, i32
  }
  func.func @transform_3(%arg0: i32, %arg1: i32) -> (i32, i32) {
    %c0_i32 = arith.constant 0 : i32
    %c0_i32_0 = arith.constant 0 : i32
    return %arg0, %c0_i32 : i32, i32
  }
  func.func @transform_4(%arg0: i32, %arg1: i32) -> (i32, i32) {
    %c0_i32 = arith.constant 0 : i32
    %c0_i32_0 = arith.constant 0 : i32
    return %arg0, %c0_i32 : i32, i32
  }
}

</mosaic_0001>

<llo_original>
// kernel: tpu_custom_call.1
$region0: #{tpu_custom_call.1}
  #allocation0 [shape = 'u32[]', space=smem, size = 0x4, offset = 0x4, fixed_abs, tag = 'smem constant byte address 0x4 - core index']
  #allocation1 [shape = 'u32[144,128]{1,0:T(1,128)}', space=vmem, size = 0x12000, scoped, tag = 'internal scratch']
  #allocation2 [shape = 'f32[128,128]{1,0:T(8,128)}', space=vmem, size = 0x10000, scoped, tag = 'scratch operand']
  %s0 = inlined_call_operand.hbm [shape: f32[256,256], index: 0, kind: input, shape index: {}]
  %s1 = inlined_call_operand.hbm [shape: f32[256,128], index: 1, kind: input, shape index: {}]
  %s2 = inlined_call_operand.hbm [shape: f32[256,128], index: 2, kind: input, shape index: {}]
  %s3 = inlined_call_operand.hbm [shape: f32[256,128], index: 3, kind: output, shape index: {0}]
  %s4 = inlined_call_operand.hbm [shape: f32[256,128], index: 4, kind: output, shape index: {1}]
  %5 = xla_tuple %s3, %s4
  %s6 = sld [smem:[#allocation0]]
  $region73: #{tpu_custom_call.1} parent=0
    _
  %s8 = ssub.s32 1, %s6
  %s9 = scalar_select 0, %s8, %s6
  $region1: #{tpu_custom_call.1} parent=0
    #allocation3 [shape = 'u8[131072]{0}', space=vmem, size = 0x20000, scoped, tag = 'input window, operand 0']
    #allocation4 [shape = 's32[2]{0}', space=sflag, size = 0x8, scoped, tag = 'scoped memory for tpu_custom_call.1']
    #allocation5 [shape = 's32[2]{0}', space=sflag, size = 0x8, scoped, tag = 'scoped memory for tpu_custom_call.1']
    #allocation6 [shape = 'u8[131072]{0}', space=vmem, size = 0x20000, scoped, tag = 'input window, operand 1']
    #allocation7 [shape = 's32[2]{0}', space=sflag, size = 0x8, scoped, tag = 'scoped memory for tpu_custom_call.1']
    #allocation8 [shape = 'u8[131072]{0}', space=vmem, size = 0x20000, scoped, tag = 'input window, operand 2']
    #allocation9 [shape = 'u8[131072]{0}', space=vmem, size = 0x20000, scoped, tag = 'output window, operand 0']
    #allocation10 [shape = 'u8[131072]{0}', space=vmem, size = 0x20000, scoped, tag = 'output window, operand 1']
    #allocation11 [shape = 's32[2]{0}', space=sflag, size = 0x8, scoped, tag = 'scoped memory for tpu_custom_call.1']
    %10 = vsyncpa [#allocation4], 0
    %s11 = scalar_lea.sflag [#allocation4], 1
    %12 = vsyncpa %s11, 0
    %13 = vsyncpa [#allocation7], 0
    %s14 = scalar_lea.sflag [#allocation7], 1
    %15 = vsyncpa %s14, 0
    %16 = vsyncpa [#allocation5], 0
    %s17 = scalar_lea.sflag [#allocation5], 1
    %18 = vsyncpa %s17, 0
    %19 = vsyncpa [#allocation11], 0
    %s20 = scalar_lea.sflag [#allocation11], 1
    %21 = vsyncpa %s20, 0
    loop: start=0, step=1, limit=6
    $region2: #{tpu_custom_call.1} parent=1 // loop_pre_header
      _
    $region3: #{tpu_custom_call.1} parent=1 // loop_header
      %s23 = sphi 0, %s27
      %p24 = scmp.ge.s32.totalorder %s23, 6
      %s30 = sphi 0, %s42
      %s31 = sphi 0, %s38
      %s32 = sphi 0, %s30
      %s33 = sphi 0, %s31
      %s34 = sphi 0, %s32
      %s35 = sphi 0, %s33
      %s47 = sphi 0, %s49
      %s50 = sphi 0, %s47
      %s51 = sphi 0, %s50
      %s67 = sphi 0, %s51
      %s73 = sphi 0, %s75
      %s76 = sphi 0, %s73
      %s77 = sphi 0, %s76
      %s93 = sphi 0, %s77
      %s99 = sphi 0, %s101
      %s102 = sphi 0, %s99
      %s103 = sphi 0, %s102
      %s119 = sphi 0, %s103
      %s125 = sphi 0, %s127
      %s128 = sphi 0, %s125
      %s129 = sphi 0, %s128
      %s145 = sphi 0, %s129
      %s151 = sphi 0, %s153
      %s154 = sphi 0, %s151
      %s155 = sphi 0, %s154
      %s171 = sphi 0, %s155
    $region4: #{tpu_custom_call.1} parent=1 // loop_header_branch
      %26 = sbr.rel (%p24) target = $region8
    $region5: #{tpu_custom_call.1} parent=1 // loop_body
      %s28 = ssub.s32 %s23, 1
      %s29 = ssub.s32 %s23, 2
      %s36 = sadd.s32 1, %s31
      %p37 = scmp.ge.s32.totalorder %s36, 2
      %s38 = scalar_select %p37, 0, %s36
      %s39 = sadd.s32 1, %s30
      %s40 = scalar_select %p37, %s39, %s30
      %p41 = scmp.ge.s32.totalorder %s40, 2
      %s42 = scalar_select %p41, 0, %s40
      %s43 = ssub.s32 %s30, %s42
      %s44 = ssub.s32 %s31, %s38
      %s45 = sor.u32 %s43, %s44
      %p46 = scmp.eq.s32.totalorder %s45, 0
      %s48 = sadd.s32 %s47, 1
      %s49 = scalar_select %p46, %s47, %s48
      %p52 = pneg %p46
      %p53 = scmp.eq.s32.totalorder %s23, 3
      %p54 = por %p52, %p53
      %p55 = scmp.ne.s32.totalorder %s47, %s50
      %p56 = scmp.eq.s32.totalorder %s23, 0
      %p57 = por %p55, %p56
      %p58 = scmp.ne.s32.totalorder %s47, %s50
      %p59 = scmp.eq.s32.totalorder %s28, 3
      %p60 = por %p58, %p59
      %p61 = scmp.ne.s32.totalorder %s50, %s51
      %p62 = scmp.eq.s32.totalorder %s28, 0
      %p63 = por %p61, %p62
      %p64 = scmp.ne.s32.totalorder %s50, %s51
      %p65 = scmp.eq.s32.totalorder %s29, 3
      %p66 = por %p64, %p65
      %p68 = scmp.ne.s32.totalorder %s51, %s67
      %p69 = scmp.eq.s32.totalorder %s29, 0
      %p70 = por %p68, %p69
      %s71 = ssub.s32 %s31, %s38
      %p72 = scmp.eq.s32.totalorder %s71, 0
      %s74 = sadd.s32 %s73, 1
      %s75 = scalar_select %p72, %s73, %s74
      %p78 = pneg %p72
      %p79 = scmp.eq.s32.totalorder %s23, 3
      %p80 = por %p78, %p79
      %p81 = scmp.ne.s32.totalorder %s73, %s76
      %p82 = scmp.eq.s32.totalorder %s23, 0
      %p83 = por %p81, %p82
      %p84 = scmp.ne.s32.totalorder %s73, %s76
      %p85 = scmp.eq.s32.totalorder %s28, 3
      %p86 = por %p84, %p85
      %p87 = scmp.ne.s32.totalorder %s76, %s77
      %p88 = scmp.eq.s32.totalorder %s28, 0
      %p89 = por %p87, %p88
      %p90 = scmp.ne.s32.totalorder %s76, %s77
      %p91 = scmp.eq.s32.totalorder %s29, 3
      %p92 = por %p90, %p91
      %p94 = scmp.ne.s32.totalorder %s77, %s93
      %p95 = scmp.eq.s32.totalorder %s29, 0
      %p96 = por %p94, %p95
      %s97 = ssub.s32 %s30, %s42
      %p98 = scmp.eq.s32.totalorder %s97, 0
      %s100 = sadd.s32 %s99, 1
      %s101 = scalar_select %p98, %s99, %s100
      %p104 = pneg %p98
      %p105 = scmp.eq.s32.totalorder %s23, 3
      %p106 = por %p104, %p105
      %p107 = scmp.ne.s32.totalorder %s99, %s102
      %p108 = scmp.eq.s32.totalorder %s23, 0
      %p109 = por %p107, %p108
      %p110 = scmp.ne.s32.totalorder %s99, %s102
      %p111 = scmp.eq.s32.totalorder %s28, 3
      %p112 = por %p110, %p111
      %p113 = scmp.ne.s32.totalorder %s102, %s103
      %p114 = scmp.eq.s32.totalorder %s28, 0
      %p115 = por %p113, %p114
      %p116 = scmp.ne.s32.totalorder %s102, %s103
      %p117 = scmp.eq.s32.totalorder %s29, 3
      %p118 = por %p116, %p117
      %p120 = scmp.ne.s32.totalorder %s103, %s119
      %p121 = scmp.eq.s32.totalorder %s29, 0
      %p122 = por %p120, %p121
      %s123 = ssub.s32 %s30, %s42
      %p124 = scmp.eq.s32.totalorder %s123, 0
      %s126 = sadd.s32 %s125, 1
      %s127 = scalar_select %p124, %s125, %s126
      %p130 = pneg %p124
      %p131 = scmp.eq.s32.totalorder %s23, 3
      %p132 = por %p130, %p131
      %p133 = scmp.ne.s32.totalorder %s125, %s128
      %p134 = scmp.eq.s32.totalorder %s23, 0
      %p135 = por %p133, %p134
      %p136 = scmp.ne.s32.totalorder %s125, %s128
      %p137 = scmp.eq.s32.totalorder %s28, 3
      %p138 = por %p136, %p137
      %p139 = scmp.ne.s32.totalorder %s128, %s129
      %p140 = scmp.eq.s32.totalorder %s28, 0
      %p141 = por %p139, %p140
      %p142 = scmp.ne.s32.totalorder %s128, %s129
      %p143 = scmp.eq.s32.totalorder %s29, 3
      %p144 = por %p142, %p143
      %p146 = scmp.ne.s32.totalorder %s129, %s145
      %p147 = scmp.eq.s32.totalorder %s29, 0
      %p148 = por %p146, %p147
      %s149 = ssub.s32 %s30, %s42
      %p150 = scmp.eq.s32.totalorder %s149, 0
      %s152 = sadd.s32 %s151, 1
      %s153 = scalar_select %p150, %s151, %s152
      %p156 = pneg %p150
      %p157 = scmp.eq.s32.totalorder %s23, 3
      %p158 = por %p156, %p157
      %p159 = scmp.ne.s32.totalorder %s151, %s154
      %p160 = scmp.eq.s32.totalorder %s23, 0
      %p161 = por %p159, %p160
      %p162 = scmp.ne.s32.totalorder %s151, %s154
      %p163 = scmp.eq.s32.totalorder %s28, 3
      %p164 = por %p162, %p163
      %p165 = scmp.ne.s32.totalorder %s154, %s155
      %p166 = scmp.eq.s32.totalorder %s28, 0
      %p167 = por %p165, %p166
      %p168 = scmp.ne.s32.totalorder %s154, %s155
      %p169 = scmp.eq.s32.totalorder %s29, 3
      %p170 = por %p168, %p169
      %p172 = scmp.ne.s32.totalorder %s155, %s171
      %p173 = scmp.eq.s32.totalorder %s29, 0
      %p174 = por %p172, %p173
      %p175 = scmp.le.s32.totalorder 1, %s23
      %p176 = scmp.lt.s32.totalorder %s23, 5
      %p177 = pnand %p175, %p176
      %p178 = pneg %p177
      // Predicated region
      $region9: #{tpu_custom_call.1} parent=5 // pred_check
        _
      $region10: #{tpu_custom_call.1} parent=5 // pred_check_branch
        %180 = sbr.rel (%p177) target = $region12
      $region11: #{tpu_custom_call.1} parent=5 // pred_region
        %s181 = ssub.s32 %s23, 1
      $region12: #{tpu_custom_call.1} parent=5 // pred_fallthru
        _
      %p182 = scmp.lt.s32.totalorder %s23, 4
      // Predicated region
      $region13: #{tpu_custom_call.1} parent=5 // pred_check
        %p183 = pneg %p182
      $region14: #{tpu_custom_call.1} parent=5 // pred_check_branch
        %185 = sbr.rel (%p183) target = $region16
      $region15: #{tpu_custom_call.1} parent=5 // pred_region
        // Predicated region
        $region17: #{tpu_custom_call.1} parent=15 // pred_check
          %p186 = pneg %p57
        $region18: #{tpu_custom_call.1} parent=15 // pred_check_branch
          %188 = sbr.rel (%p186) target = $region20
        $region19: #{tpu_custom_call.1} parent=15 // pred_region
          %s189 = sand.u32 %s47, 1
          %s190 = scalar_lea.sflag [#allocation4], %s189
          %s191 = sand.u32 %s47, 1
          %s192 = smul.addr %s191, 128
          %s193 = scalar_lea.vmem [#allocation3], %s192
          %s194 = smul.u32 16, %s30
          %s196 = ssub.s32 2048, 2048
          %197 = vsyncadd %s190, %s196
          %s198 = smul.addr %s194, 2
          %s199 = sadd.s32 %s31, %s198
          %s200 = smul.addr %s199, 128
          %s201 = scalar_lea.hbm %s0, %s200
          %s202 = sshll.u32 %s193, 4
          %s203 = int_to_ptr.vmem [resolvable:$true] %s202
          %208 = dma.hbm_to_vmem [thread:$0]  %s201, 2048, %s203, %s190, 256, 128, 8
        $region20: #{tpu_custom_call.1} parent=15 // pred_fallthru
          _
        // Predicated region
        $region21: #{tpu_custom_call.1} parent=15 // pred_check
          %p209 = pneg %p83
        $region22: #{tpu_custom_call.1} parent=15 // pred_check_branch
          %211 = sbr.rel (%p209) target = $region24
        $region23: #{tpu_custom_call.1} parent=15 // pred_region
          %s212 = sand.u32 %s23, 1
          %s213 = scalar_lea.sflag [#allocation7], %s212
          %s214 = sand.u32 %s73, 1
          %s215 = smul.addr %s214, 128
          %s216 = scalar_lea.vmem [#allocation6], %s215
          %s217 = smul.u32 16, %s31
          %s219 = ssub.s32 2048, 2048
          %220 = vsyncadd %s213, %s219
          %s221 = smul.addr %s217, 128
          %s222 = scalar_lea.hbm %s1, %s221
          %s223 = sshll.u32 %s216, 4
          %s224 = int_to_ptr.vmem [resolvable:$true] %s223
          %229 = dma.hbm_to_vmem [thread:$0]  %s222, 2048, %s224, %s213, 128, 128, 8
        $region24: #{tpu_custom_call.1} parent=15 // pred_fallthru
          _
        // Predicated region
        $region25: #{tpu_custom_call.1} parent=15 // pred_check
          %p230 = pneg %p109
        $region26: #{tpu_custom_call.1} parent=15 // pred_check_branch
          %232 = sbr.rel (%p230) target = $region28
        $region27: #{tpu_custom_call.1} parent=15 // pred_region
          %s233 = sand.u32 %s23, 1
          %s234 = scalar_lea.sflag [#allocation7], %s233
          %s235 = sand.u32 %s99, 1
          %s236 = smul.addr %s235, 128
          %s237 = scalar_lea.vmem [#allocation8], %s236
          %s238 = smul.u32 16, %s30
          %s240 = ssub.s32 2048, 2048
          %241 = vsyncadd %s234, %s240
          %s242 = smul.addr %s238, 128
          %s243 = scalar_lea.hbm %s2, %s242
          %s244 = sshll.u32 %s237, 4
          %s245 = int_to_ptr.vmem [resolvable:$true] %s244
          %250 = dma.hbm_to_vmem [thread:$0]  %s243, 2048, %s245, %s234, 128, 128, 8
        $region28: #{tpu_custom_call.1} parent=15 // pred_fallthru
          _
      $region16: #{tpu_custom_call.1} parent=5 // pred_fallthru
        _
      %p251 = scmp.le.s32.totalorder 1, %s23
      %p252 = scmp.lt.s32.totalorder %s23, 5
      %p253 = pnand %p251, %p252
      %p254 = pneg %p253
      // Predicated region
      $region29: #{tpu_custom_call.1} parent=5 // pred_check
        _
      $region30: #{tpu_custom_call.1} parent=5 // pred_check_branch
        %256 = sbr.rel (%p253) target = $region32
      $region31: #{tpu_custom_call.1} parent=5 // pred_region
        %s257 = ssub.s32 %s23, 1
        %s258 = sand.u32 %s50, 1
        %s259 = scalar_lea.sflag [#allocation4], %s258
        %s260 = sand.u32 %s50, 1
        %s261 = smul.addr %s260, 128
        %s262 = scalar_lea.vmem [#allocation3], %s261
        // Predicated region
        $region33: #{tpu_custom_call.1} parent=31 // pred_check
          %p263 = pneg %p63
        $region34: #{tpu_custom_call.1} parent=31 // pred_check_branch
          %265 = sbr.rel (%p263) target = $region36
        $region35: #{tpu_custom_call.1} parent=31 // pred_region
          %266 = dma.done %s259, 2048
        $region36: #{tpu_custom_call.1} parent=31 // pred_fallthru
          _
        %s267 = sand.u32 %s28, 1
        %s268 = scalar_lea.sflag [#allocation7], %s267
        %s269 = sand.u32 %s76, 1
        %s270 = smul.addr %s269, 128
        %s271 = scalar_lea.vmem [#allocation6], %s270
        // Predicated region
        $region37: #{tpu_custom_call.1} parent=31 // pred_check
          %p272 = pneg %p89
        $region38: #{tpu_custom_call.1} parent=31 // pred_check_branch
          %274 = sbr.rel (%p272) target = $region40
        $region39: #{tpu_custom_call.1} parent=31 // pred_region
          %275 = dma.done %s268, 2048
        $region40: #{tpu_custom_call.1} parent=31 // pred_fallthru
          _
        %s276 = sand.u32 %s28, 1
        %s277 = scalar_lea.sflag [#allocation7], %s276
        %s278 = sand.u32 %s102, 1
        %s279 = smul.addr %s278, 128
        %s280 = scalar_lea.vmem [#allocation8], %s279
        // Predicated region
        $region41: #{tpu_custom_call.1} parent=31 // pred_check
          %p281 = pneg %p115
        $region42: #{tpu_custom_call.1} parent=31 // pred_check_branch
          %283 = sbr.rel (%p281) target = $region44
        $region43: #{tpu_custom_call.1} parent=31 // pred_region
          %284 = dma.done %s277, 2048
        $region44: #{tpu_custom_call.1} parent=31 // pred_fallthru
          _
        %s285 = sand.u32 %s50, 1
        %s286 = scalar_lea.sflag [#allocation4], %s285
        %s287 = sand.u32 %s50, 1
        %s288 = smul.addr %s287, 128
        %s289 = scalar_lea.vmem [#allocation3], %s288
        %p290 = pneg %p63
        %p291 = pneg %p60
        %s292 = sand.u32 %s28, 1
        %s293 = scalar_lea.sflag [#allocation7], %s292
        %s294 = sand.u32 %s76, 1
        %s295 = smul.addr %s294, 128
        %s296 = scalar_lea.vmem [#allocation6], %s295
        %p297 = pneg %p89
        %p298 = pneg %p86
        %s299 = sand.u32 %s28, 1
        %s300 = scalar_lea.sflag [#allocation7], %s299
        %s301 = sand.u32 %s102, 1
        %s302 = smul.addr %s301, 128
        %s303 = scalar_lea.vmem [#allocation8], %s302
        %p304 = pneg %p115
        %p305 = pneg %p112
        %p306 = pneg %p141
        %p307 = pneg %p138
        %s308 = sand.u32 %s128, 1
        %s309 = scalar_lea.sflag [#allocation5], %s308
        %s310 = sand.u32 %s128, 1
        %s311 = smul.addr %s310, 128
        %s312 = scalar_lea.vmem [#allocation9], %s311
        %p313 = pneg %p167
        %p314 = pneg %p164
        %s315 = sand.u32 %s154, 1
        %s316 = scalar_lea.sflag [#allocation11], %s315
        %s317 = sand.u32 %s154, 1
        %s318 = smul.addr %s317, 128
        %s319 = scalar_lea.vmem [#allocation10], %s318
        %s320 = smul.u32 16, %s32
        %s321 = smul.u32 16, %s33
        %s322 = smul.u32 16, %s32
        %s323 = smul.u32 16, %s32
        %s324 = smul.u32 16, %s32
        %p325 = scmp.eq.s32.totalorder %s33, 0
        // Predicated region
        $region45: #{tpu_custom_call.1} parent=31 // pred_check
          %p326 = pneg %p325
        $region46: #{tpu_custom_call.1} parent=31 // pred_check_branch
          %328 = sbr.rel (%p326) target = $region48
        $region47: #{tpu_custom_call.1} parent=31 // pred_region
          %329 = vst [vmem:[#allocation2] sm:$0xff] 0.0
          %330 = vst [vmem:[#allocation2 + $0x8] sm:$0xff] 0.0
          %331 = vst [vmem:[#allocation2 + $0x10] sm:$0xff] 0.0
          %332 = vst [vmem:[#allocation2 + $0x18] sm:$0xff] 0.0
          %333 = vst [vmem:[#allocation2 + $0x20] sm:$0xff] 0.0
          %334 = vst [vmem:[#allocation2 + $0x28] sm:$0xff] 0.0
          %335 = vst [vmem:[#allocation2 + $0x30] sm:$0xff] 0.0
          %336 = vst [vmem:[#allocation2 + $0x38] sm:$0xff] 0.0
          %337 = vst [vmem:[#allocation2 + $0x40] sm:$0xff] 0.0
          %338 = vst [vmem:[#allocation2 + $0x48] sm:$0xff] 0.0
          %339 = vst [vmem:[#allocation2 + $0x50] sm:$0xff] 0.0
          %340 = vst [vmem:[#allocation2 + $0x58] sm:$0xff] 0.0
          %341 = vst [vmem:[#allocation2 + $0x60] sm:$0xff] 0.0
          %342 = vst [vmem:[#allocation2 + $0x68] sm:$0xff] 0.0
          %343 = vst [vmem:[#allocation2 + $0x70] sm:$0xff] 0.0
          %344 = vst [vmem:[#allocation2 + $0x78] sm:$0xff] 0.0
        $region48: #{tpu_custom_call.1} parent=31 // pred_fallthru
          _
        %v345 = vld [vmem:[#allocation2] sm:$0xff]
        %v346 = vld [vmem:[#allocation2 + $0x8] sm:$0xff]
        %v347 = vld [vmem:[#allocation2 + $0x10] sm:$0xff]
        %v348 = vld [vmem:[#allocation2 + $0x18] sm:$0xff]
        %v349 = vld [vmem:[#allocation2 + $0x20] sm:$0xff]
        %v350 = vld [vmem:[#allocation2 + $0x28] sm:$0xff]
        %v351 = vld [vmem:[#allocation2 + $0x30] sm:$0xff]
        %v352 = vld [vmem:[#allocation2 + $0x38] sm:$0xff]
        %v353 = vld [vmem:[#allocation2 + $0x40] sm:$0xff]
        %v354 = vld [vmem:[#allocation2 + $0x48] sm:$0xff]
        %v355 = vld [vmem:[#allocation2 + $0x50] sm:$0xff]
        %v356 = vld [vmem:[#allocation2 + $0x58] sm:$0xff]
        %v357 = vld [vmem:[#allocation2 + $0x60] sm:$0xff]
        %v358 = vld [vmem:[#allocation2 + $0x68] sm:$0xff]
        %v359 = vld [vmem:[#allocation2 + $0x70] sm:$0xff]
        %v360 = vld [vmem:[#allocation2 + $0x78] sm:$0xff]
        %v361 = vld [vmem:[%s262] sm:$0xff]
        %v362 = vld [vmem:[%s262 + $0x8] sm:$0xff]
        %v363 = vld [vmem:[%s262 + $0x10] sm:$0xff]
        %v364 = vld [vmem:[%s262 + $0x18] sm:$0xff]
        %v365 = vld [vmem:[%s262 + $0x20] sm:$0xff]
        %v366 = vld [vmem:[%s262 + $0x28] sm:$0xff]
        %v367 = vld [vmem:[%s262 + $0x30] sm:$0xff]
        %v368 = vld [vmem:[%s262 + $0x38] sm:$0xff]
        %v369 = vld [vmem:[%s262 + $0x40] sm:$0xff]
        %v370 = vld [vmem:[%s262 + $0x48] sm:$0xff]
        %v371 = vld [vmem:[%s262 + $0x50] sm:$0xff]
        %v372 = vld [vmem:[%s262 + $0x58] sm:$0xff]
        %v373 = vld [vmem:[%s262 + $0x60] sm:$0xff]
        %v374 = vld [vmem:[%s262 + $0x68] sm:$0xff]
        %v375 = vld [vmem:[%s262 + $0x70] sm:$0xff]
        %v376 = vld [vmem:[%s262 + $0x78] sm:$0xff]
        %v377 = vld [vmem:[%s271] sm:$0xff]
        %v378 = vld [vmem:[%s271 + $0x8] sm:$0xff]
        %v379 = vld [vmem:[%s271 + $0x10] sm:$0xff]
        %v380 = vld [vmem:[%s271 + $0x18] sm:$0xff]
        %v381 = vld [vmem:[%s271 + $0x20] sm:$0xff]
        %v382 = vld [vmem:[%s271 + $0x28] sm:$0xff]
        %v383 = vld [vmem:[%s271 + $0x30] sm:$0xff]
        %v384 = vld [vmem:[%s271 + $0x38] sm:$0xff]
        %v385 = vld [vmem:[%s271 + $0x40] sm:$0xff]
        %v386 = vld [vmem:[%s271 + $0x48] sm:$0xff]
        %v387 = vld [vmem:[%s271 + $0x50] sm:$0xff]
        %v388 = vld [vmem:[%s271 + $0x58] sm:$0xff]
        %v389 = vld [vmem:[%s271 + $0x60] sm:$0xff]
        %v390 = vld [vmem:[%s271 + $0x68] sm:$0xff]
        %v391 = vld [vmem:[%s271 + $0x70] sm:$0xff]
        %v392 = vld [vmem:[%s271 + $0x78] sm:$0xff]
        %393 = vmatprep.subr.mxu0 0.0
        %394 = vmatpush1.msra.mxu0 %v377
        %395 = vmatprep.subr.mxu0 0.0
        %396 = vmatpush1.msra.mxu0 %v378
        %397 = vmatprep.subr.mxu0 0.0
        %398 = vmatpush1.msra.mxu0 %v379
        %399 = vmatprep.subr.mxu0 0.0
        %400 = vmatpush1.msra.mxu0 %v380
        %401 = vmatprep.subr.mxu0 0.0
        %402 = vmatpush1.msra.mxu0 %v381
        %403 = vmatprep.subr.mxu0 0.0
        %404 = vmatpush1.msra.mxu0 %v382
        %405 = vmatprep.subr.mxu0 0.0
        %406 = vmatpush1.msra.mxu0 %v383
        %407 = vmatprep.subr.mxu0 0.0
        %408 = vmatpush1.msra.mxu0 %v384
        %409 = vmatprep.subr.mxu0 0.0
        %410 = vmatpush1.msra.mxu0 %v385
        %411 = vmatprep.subr.mxu0 0.0
        %412 = vmatpush1.msra.mxu0 %v386
        %413 = vmatprep.subr.mxu0 0.0
        %414 = vmatpush1.msra.mxu0 %v387
        %415 = vmatprep.subr.mxu0 0.0
        %416 = vmatpush1.msra.mxu0 %v388
        %417 = vmatprep.subr.mxu0 0.0
        %418 = vmatpush1.msra.mxu0 %v389
        %419 = vmatprep.subr.mxu0 0.0
        %420 = vmatpush1.msra.mxu0 %v390
        %421 = vmatprep.subr.mxu0 0.0
        %422 = vmatpush1.msra.mxu0 %v391
        %423 = vmatprep.subr.mxu0 0.0
        %424 = vmatpush1.msra.mxu0 %v392
        %425 = vmatprep.subr.mxu0 0.0
        %426 = vmatpush1.msra.mxu0 0.0
        %427 = vmatprep.subr.mxu0 0.0
        %428 = vmatpush1.msra.mxu0 0.0
        %429 = vmatprep.subr.mxu0 0.0
        %430 = vmatpush1.msra.mxu0 0.0
        %431 = vmatprep.subr.mxu0 0.0
        %432 = vmatpush1.msra.mxu0 0.0
        %433 = vmatprep.subr.mxu0 0.0
        %434 = vmatpush1.msra.mxu0 0.0
        %435 = vmatprep.subr.mxu0 0.0
        %436 = vmatpush1.msra.mxu0 0.0
        %437 = vmatprep.subr.mxu0 0.0
        %438 = vmatpush1.msra.mxu0 0.0
        %439 = vmatprep.subr.mxu0 0.0
        %440 = vmatpush1.msra.mxu0 0.0
        %441 = vmatprep.subr.mxu0 0.0
        %442 = vmatpush1.msra.mxu0 0.0
        %443 = vmatprep.subr.mxu0 0.0
        %444 = vmatpush1.msra.mxu0 0.0
        %445 = vmatprep.subr.mxu0 0.0
        %446 = vmatpush1.msra.mxu0 0.0
        %447 = vmatprep.subr.mxu0 0.0
        %448 = vmatpush1.msra.mxu0 0.0
        %449 = vmatprep.subr.mxu0 0.0
        %450 = vmatpush1.msra.mxu0 0.0
        %451 = vmatprep.subr.mxu0 0.0
        %452 = vmatpush1.msra.mxu0 0.0
        %453 = vmatprep.subr.mxu0 0.0
        %454 = vmatpush1.msra.mxu0 0.0
        %455 = vmatprep.subr.mxu0 0.0
        %456 = vmatpush1.msra.mxu0 0.0
        %457 = vmatprep.mubr.f32.mxu0 0.0
        %458 = vmatmul.mubr.f32.gmra.mrb[0].mxu0 %v361
        %v459 = vpop.f32.mrb[0].mxu0
        %v460 = vadd.f32 0.0, %v459
        %v461 = vpop.f32.mrb[0].mxu0
        %462 = vmatprep.mubr.f32.mxu0 0.0
        %463 = vmatmul.mubr.f32.gmra.mrb[0].mxu0 %v362
        %v464 = vpop.f32.mrb[0].mxu0
        %v465 = vadd.f32 0.0, %v464
        %v466 = vpop.f32.mrb[0].mxu0
        %467 = vmatprep.mubr.f32.mxu0 0.0
        %468 = vmatmul.mubr.f32.gmra.mrb[0].mxu0 %v363
        %v469 = vpop.f32.mrb[0].mxu0
        %v470 = vadd.f32 0.0, %v469
        %v471 = vpop.f32.mrb[0].mxu0
        %472 = vmatprep.mubr.f32.mxu0 0.0
        %473 = vmatmul.mubr.f32.gmra.mrb[0].mxu0 %v364
        %v474 = vpop.f32.mrb[0].mxu0
        %v475 = vadd.f32 0.0, %v474
        %v476 = vpop.f32.mrb[0].mxu0
        %477 = vmatprep.mubr.f32.mxu0 0.0
        %478 = vmatmul.mubr.f32.gmra.mrb[0].mxu0 %v365
        %v479 = vpop.f32.mrb[0].mxu0
        %v480 = vadd.f32 0.0, %v479
        %v481 = vpop.f32.mrb[0].mxu0
        %482 = vmatprep.mubr.f32.mxu0 0.0
        %483 = vmatmul.mubr.f32.gmra.mrb[0].mxu0 %v366
        %v484 = vpop.f32.mrb[0].mxu0
        %v485 = vadd.f32 0.0, %v484
        %v486 = vpop.f32.mrb[0].mxu0
        %487 = vmatprep.mubr.f32.mxu0 0.0
        %488 = vmatmul.mubr.f32.gmra.mrb[0].mxu0 %v367
        %v489 = vpop.f32.mrb[0].mxu0
        %v490 = vadd.f32 0.0, %v489
        %v491 = vpop.f32.mrb[0].mxu0
        %492 = vmatprep.mubr.f32.mxu0 0.0
        %493 = vmatmul.mubr.f32.gmra.mrb[0].mxu0 %v368
        %v494 = vpop.f32.mrb[0].mxu0
        %v495 = vadd.f32 0.0, %v494
        %v496 = vpop.f32.mrb[0].mxu0
        %497 = vmatprep.mubr.f32.mxu0 0.0
        %498 = vmatmul.mubr.f32.gmra.mrb[0].mxu0 %v369
        %v499 = vpop.f32.mrb[0].mxu0
        %v500 = vadd.f32 0.0, %v499
        %v501 = vpop.f32.mrb[0].mxu0
        %502 = vmatprep.mubr.f32.mxu0 0.0
        %503 = vmatmul.mubr.f32.gmra.mrb[0].mxu0 %v370
        %v504 = vpop.f32.mrb[0].mxu0
        %v505 = vadd.f32 0.0, %v504
        %v506 = vpop.f32.mrb[0].mxu0
        %507 = vmatprep.mubr.f32.mxu0 0.0
        %508 = vmatmul.mubr.f32.gmra.mrb[0].mxu0 %v371
        %v509 = vpop.f32.mrb[0].mxu0
        %v510 = vadd.f32 0.0, %v509
        %v511 = vpop.f32.mrb[0].mxu0
        %512 = vmatprep.mubr.f32.mxu0 0.0
        %513 = vmatmul.mubr.f32.gmra.mrb[0].mxu0 %v372
        %v514 = vpop.f32.mrb[0].mxu0
        %v515 = vadd.f32 0.0, %v514
        %v516 = vpop.f32.mrb[0].mxu0
        %517 = vmatprep.mubr.f32.mxu0 0.0
        %518 = vmatmul.mubr.f32.gmra.mrb[0].mxu0 %v373
        %v519 = vpop.f32.mrb[0].mxu0
        %v520 = vadd.f32 0.0, %v519
        %v521 = vpop.f32.mrb[0].mxu0
        %522 = vmatprep.mubr.f32.mxu0 0.0
        %523 = vmatmul.mubr.f32.gmra.mrb[0].mxu0 %v374
        %v524 = vpop.f32.mrb[0].mxu0
        %v525 = vadd.f32 0.0, %v524
        %v526 = vpop.f32.mrb[0].mxu0
        %527 = vmatprep.mubr.f32.mxu0 0.0
        %528 = vmatmul.mubr.f32.gmra.mrb[0].mxu0 %v375
        %v529 = vpop.f32.mrb[0].mxu0
        %v530 = vadd.f32 0.0, %v529
        %v531 = vpop.f32.mrb[0].mxu0
        %532 = vmatprep.mubr.f32.mxu0 0.0
        %533 = vmatmul.mubr.f32.gmra.mrb[0].mxu0 %v376
        %v534 = vpop.f32.mrb[0].mxu0
        %v535 = vadd.f32 0.0, %v534
        %v536 = vpop.f32.mrb[0].mxu0
        %537 = vdwg.mxu0
        %v538 = vadd.f32 %v345, %v460
        %v539 = vadd.f32 %v346, %v465
        %v540 = vadd.f32 %v347, %v470
        %v541 = vadd.f32 %v348, %v475
        %v542 = vadd.f32 %v349, %v480
        %v543 = vadd.f32 %v350, %v485
        %v544 = vadd.f32 %v351, %v490
        %v545 = vadd.f32 %v352, %v495
        %v546 = vadd.f32 %v353, %v500
        %v547 = vadd.f32 %v354, %v505
        %v548 = vadd.f32 %v355, %v510
        %v549 = vadd.f32 %v356, %v515
        %v550 = vadd.f32 %v357, %v520
        %v551 = vadd.f32 %v358, %v525
        %v552 = vadd.f32 %v359, %v530
        %v553 = vadd.f32 %v360, %v535
        %554 = vst [vmem:[#allocation2] sm:$0xff] %v538
        %555 = vst [vmem:[#allocation2 + $0x8] sm:$0xff] %v539
        %556 = vst [vmem:[#allocation2 + $0x10] sm:$0xff] %v540
        %557 = vst [vmem:[#allocation2 + $0x18] sm:$0xff] %v541
        %558 = vst [vmem:[#allocation2 + $0x20] sm:$0xff] %v542
        %559 = vst [vmem:[#allocation2 + $0x28] sm:$0xff] %v543
        %560 = vst [vmem:[#allocation2 + $0x30] sm:$0xff] %v544
        %561 = vst [vmem:[#allocation2 + $0x38] sm:$0xff] %v545
        %562 = vst [vmem:[#allocation2 + $0x40] sm:$0xff] %v546
        %563 = vst [vmem:[#allocation2 + $0x48] sm:$0xff] %v547
        %564 = vst [vmem:[#allocation2 + $0x50] sm:$0xff] %v548
        %565 = vst [vmem:[#allocation2 + $0x58] sm:$0xff] %v549
        %566 = vst [vmem:[#allocation2 + $0x60] sm:$0xff] %v550
        %567 = vst [vmem:[#allocation2 + $0x68] sm:$0xff] %v551
        %568 = vst [vmem:[#allocation2 + $0x70] sm:$0xff] %v552
        %569 = vst [vmem:[#allocation2 + $0x78] sm:$0xff] %v553
        %p570 = scmp.eq.s32.totalorder %s33, 1
        // Predicated region
        $region49: #{tpu_custom_call.1} parent=31 // pred_check
          %p571 = pneg %p570
        $region50: #{tpu_custom_call.1} parent=31 // pred_check_branch
          %573 = sbr.rel (%p571) target = $region52
        $region51: #{tpu_custom_call.1} parent=31 // pred_region
          %v574 = vld [vmem:[#allocation2] sm:$0xff]
          %v575 = vld [vmem:[#allocation2 + $0x8] sm:$0xff]
          %v576 = vld [vmem:[#allocation2 + $0x10] sm:$0xff]
          %v577 = vld [vmem:[#allocation2 + $0x18] sm:$0xff]
          %v578 = vld [vmem:[#allocation2 + $0x20] sm:$0xff]
          %v579 = vld [vmem:[#allocation2 + $0x28] sm:$0xff]
          %v580 = vld [vmem:[#allocation2 + $0x30] sm:$0xff]
          %v581 = vld [vmem:[#allocation2 + $0x38] sm:$0xff]
          %v582 = vld [vmem:[#allocation2 + $0x40] sm:$0xff]
          %v583 = vld [vmem:[#allocation2 + $0x48] sm:$0xff]
          %v584 = vld [vmem:[#allocation2 + $0x50] sm:$0xff]
          %v585 = vld [vmem:[#allocation2 + $0x58] sm:$0xff]
          %v586 = vld [vmem:[#allocation2 + $0x60] sm:$0xff]
          %v587 = vld [vmem:[#allocation2 + $0x68] sm:$0xff]
          %v588 = vld [vmem:[#allocation2 + $0x70] sm:$0xff]
          %v589 = vld [vmem:[#allocation2 + $0x78] sm:$0xff]
          %590 = vst [vmem:[%s312] sm:$0xff] %v574
          %591 = vst [vmem:[%s312 + $0x8] sm:$0xff] %v575
          %592 = vst [vmem:[%s312 + $0x10] sm:$0xff] %v576
          %593 = vst [vmem:[%s312 + $0x18] sm:$0xff] %v577
          %594 = vst [vmem:[%s312 + $0x20] sm:$0xff] %v578
          %595 = vst [vmem:[%s312 + $0x28] sm:$0xff] %v579
          %596 = vst [vmem:[%s312 + $0x30] sm:$0xff] %v580
          %597 = vst [vmem:[%s312 + $0x38] sm:$0xff] %v581
          %598 = vst [vmem:[%s312 + $0x40] sm:$0xff] %v582
          %599 = vst [vmem:[%s312 + $0x48] sm:$0xff] %v583
          %600 = vst [vmem:[%s312 + $0x50] sm:$0xff] %v584
          %601 = vst [vmem:[%s312 + $0x58] sm:$0xff] %v585
          %602 = vst [vmem:[%s312 + $0x60] sm:$0xff] %v586
          %603 = vst [vmem:[%s312 + $0x68] sm:$0xff] %v587
          %604 = vst [vmem:[%s312 + $0x70] sm:$0xff] %v588
          %605 = vst [vmem:[%s312 + $0x78] sm:$0xff] %v589
          %v606 = vld [vmem:[%s280] sm:$0xff]
          %v607 = vld [vmem:[%s280 + $0x8] sm:$0xff]
          %v608 = vld [vmem:[%s280 + $0x10] sm:$0xff]
          %v609 = vld [vmem:[%s280 + $0x18] sm:$0xff]
          %v610 = vld [vmem:[%s280 + $0x20] sm:$0xff]
          %v611 = vld [vmem:[%s280 + $0x28] sm:$0xff]
          %v612 = vld [vmem:[%s280 + $0x30] sm:$0xff]
          %v613 = vld [vmem:[%s280 + $0x38] sm:$0xff]
          %v614 = vld [vmem:[%s280 + $0x40] sm:$0xff]
          %v615 = vld [vmem:[%s280 + $0x48] sm:$0xff]
          %v616 = vld [vmem:[%s280 + $0x50] sm:$0xff]
          %v617 = vld [vmem:[%s280 + $0x58] sm:$0xff]
          %v618 = vld [vmem:[%s280 + $0x60] sm:$0xff]
          %v619 = vld [vmem:[%s280 + $0x68] sm:$0xff]
          %v620 = vld [vmem:[%s280 + $0x70] sm:$0xff]
          %v621 = vld [vmem:[%s280 + $0x78] sm:$0xff]
          %v622 = vadd.f32 %v606, %v574
          %v623 = vadd.f32 %v607, %v575
          %v624 = vadd.f32 %v608, %v576
          %v625 = vadd.f32 %v609, %v577
          %v626 = vadd.f32 %v610, %v578
          %v627 = vadd.f32 %v611, %v579
          %v628 = vadd.f32 %v612, %v580
          %v629 = vadd.f32 %v613, %v581
          %v630 = vadd.f32 %v614, %v582
          %v631 = vadd.f32 %v615, %v583
          %v632 = vadd.f32 %v616, %v584
          %v633 = vadd.f32 %v617, %v585
          %v634 = vadd.f32 %v618, %v586
          %v635 = vadd.f32 %v619, %v587
          %v636 = vadd.f32 %v620, %v588
          %v637 = vadd.f32 %v621, %v589
          %638 = vst [vmem:[%s319] sm:$0xff] %v622
          %639 = vst [vmem:[%s319 + $0x8] sm:$0xff] %v623
          %640 = vst [vmem:[%s319 + $0x10] sm:$0xff] %v624
          %641 = vst [vmem:[%s319 + $0x18] sm:$0xff] %v625
          %642 = vst [vmem:[%s319 + $0x20] sm:$0xff] %v626
          %643 = vst [vmem:[%s319 + $0x28] sm:$0xff] %v627
          %644 = vst [vmem:[%s319 + $0x30] sm:$0xff] %v628
          %645 = vst [vmem:[%s319 + $0x38] sm:$0xff] %v629
          %646 = vst [vmem:[%s319 + $0x40] sm:$0xff] %v630
          %647 = vst [vmem:[%s319 + $0x48] sm:$0xff] %v631
          %648 = vst [vmem:[%s319 + $0x50] sm:$0xff] %v632
          %649 = vst [vmem:[%s319 + $0x58] sm:$0xff] %v633
          %650 = vst [vmem:[%s319 + $0x60] sm:$0xff] %v634
          %651 = vst [vmem:[%s319 + $0x68] sm:$0xff] %v635
          %652 = vst [vmem:[%s319 + $0x70] sm:$0xff] %v636
          %653 = vst [vmem:[%s319 + $0x78] sm:$0xff] %v637
        $region52: #{tpu_custom_call.1} parent=31 // pred_fallthru
          _
        %s654 = sand.u32 %s128, 1
        %s655 = scalar_lea.sflag [#allocation5], %s654
        %s656 = sand.u32 %s128, 1
        %s657 = smul.addr %s656, 128
        %s658 = scalar_lea.vmem [#allocation9], %s657
        %s659 = sand.u32 %s154, 1
        %s660 = scalar_lea.sflag [#allocation11], %s659
        %s661 = sand.u32 %s154, 1
        %s662 = smul.addr %s661, 128
        %s663 = scalar_lea.vmem [#allocation10], %s662
        // Predicated region
        $region53: #{tpu_custom_call.1} parent=31 // pred_check
          %p664 = pneg %p138
        $region54: #{tpu_custom_call.1} parent=31 // pred_check_branch
          %666 = sbr.rel (%p664) target = $region56
        $region55: #{tpu_custom_call.1} parent=31 // pred_region
          %s667 = smul.u32 16, %s32
          %s669 = ssub.s32 2048, 2048
          %670 = vsyncadd %s655, %s669
          %s671 = smul.addr %s667, 128
          %s672 = scalar_lea.hbm %s3, %s671
          %s673 = sshll.u32 %s658, 4
          %s674 = int_to_ptr.vmem [resolvable:$true] %s673
          %679 = dma.vmem_to_hbm [thread:$0]  %s674, 2048, %s672, %s655, 128, 128, 8
        $region56: #{tpu_custom_call.1} parent=31 // pred_fallthru
          _
        // Predicated region
        $region57: #{tpu_custom_call.1} parent=31 // pred_check
          %p680 = pneg %p164
        $region58: #{tpu_custom_call.1} parent=31 // pred_check_branch
          %682 = sbr.rel (%p680) target = $region60
        $region59: #{tpu_custom_call.1} parent=31 // pred_region
          %s683 = smul.u32 16, %s32
          %s685 = ssub.s32 2048, 2048
          %686 = vsyncadd %s660, %s685
          %s687 = smul.addr %s683, 128
          %s688 = scalar_lea.hbm %s4, %s687
          %s689 = sshll.u32 %s663, 4
          %s690 = int_to_ptr.vmem [resolvable:$true] %s689
          %695 = dma.vmem_to_hbm [thread:$0]  %s690, 2048, %s688, %s660, 128, 128, 8
        $region60: #{tpu_custom_call.1} parent=31 // pred_fallthru
          _
      $region32: #{tpu_custom_call.1} parent=5 // pred_fallthru
        _
      %p696 = scmp.le.s32.totalorder 2, %s23
      // Predicated region
      $region61: #{tpu_custom_call.1} parent=5 // pred_check
        %p697 = pneg %p696
      $region62: #{tpu_custom_call.1} parent=5 // pred_check_branch
        %699 = sbr.rel (%p697) target = $region64
      $region63: #{tpu_custom_call.1} parent=5 // pred_region
        %s700 = ssub.s32 %s23, 2
        // Predicated region
        $region65: #{tpu_custom_call.1} parent=63 // pred_check
          %p701 = pneg %p144
        $region66: #{tpu_custom_call.1} parent=63 // pred_check_branch
          %703 = sbr.rel (%p701) target = $region68
        $region67: #{tpu_custom_call.1} parent=63 // pred_region
          %s704 = sand.u32 %s129, 1
          %s705 = scalar_lea.sflag [#allocation5], %s704
          %s706 = sand.u32 %s129, 1
          %s707 = smul.addr %s706, 128
          %s708 = scalar_lea.vmem [#allocation9], %s707
          %709 = dma.done %s705, 2048
        $region68: #{tpu_custom_call.1} parent=63 // pred_fallthru
          _
        // Predicated region
        $region69: #{tpu_custom_call.1} parent=63 // pred_check
          %p710 = pneg %p170
        $region70: #{tpu_custom_call.1} parent=63 // pred_check_branch
          %712 = sbr.rel (%p710) target = $region72
        $region71: #{tpu_custom_call.1} parent=63 // pred_region
          %s713 = sand.u32 %s155, 1
          %s714 = scalar_lea.sflag [#allocation11], %s713
          %s715 = sand.u32 %s155, 1
          %s716 = smul.addr %s715, 128
          %s717 = scalar_lea.vmem [#allocation10], %s716
          %718 = dma.done %s714, 2048
        $region72: #{tpu_custom_call.1} parent=63 // pred_fallthru
          _
      $region64: #{tpu_custom_call.1} parent=5 // pred_fallthru
        _
    $region6: #{tpu_custom_call.1} parent=1 // loop_footer
      %s27 = sadd.s32 1, %s23
    $region7: #{tpu_custom_call.1} parent=1 // loop_footer_branch
      %22 = sbr.rel target = $region3
    $region8: #{tpu_custom_call.1} parent=1 // loop_exit
      _
    %719 = vsyncpa [#allocation4], 1
    %s720 = scalar_lea.sflag [#allocation4], 1
    %721 = vsyncpa %s720, 1
    %722 = vsyncpa [#allocation7], 1
    %s723 = scalar_lea.sflag [#allocation7], 1
    %724 = vsyncpa %s723, 1
    %725 = vsyncpa [#allocation5], 1
    %s726 = scalar_lea.sflag [#allocation5], 1
    %727 = vsyncpa %s726, 1
    %728 = vsyncpa [#allocation11], 1
    %s729 = scalar_lea.sflag [#allocation11], 1
    %730 = vsyncpa %s729, 1

</llo_original>
